<compile_context>
chip_gen: v6e
topology: v6e:2x2x1
jax: 0.10.0
libtpu: 0.0.40
codegen_flags: <defaults>
</compile_context>

<pallas_src>
import jax
import jax.numpy as jnp
from jax import lax
from jax.experimental import pallas as pl
from jax.experimental.pallas import tpu as pltpu

N_CLASSES = 16
EMBED_DIM = 128
UCG_RATE = 0.1


def _row_gather_kernel(idx_ref, row_ref, out_ref):
    """Copy the index_map-selected embedding row to the output slot.

    idx_ref : SMEM (B,)      int32   scalar-prefetch class ids (consumed by the index_maps)
    row_ref : VMEM (1, 1, E)         embedding_table[idx[i]] for the current grid step
    out_ref : VMEM (1, 1, E)         output row i
    """
    del idx_ref  # only used by the BlockSpec index_maps
    out_ref[...] = row_ref[...]


def class_embedder_forward(batch, embedding_table, *, rng, key="class",
                           ucg_rate=UCG_RATE, n_classes=None,
                           disable_dropout=False):
    """JAX wrapper reproducing ClassEmbedder.forward."""
    c = batch[key].astype(jnp.int32)  # (B,)
    B = c.shape[0]
    N, E = embedding_table.shape
    if n_classes is None:
        n_classes = N

    if ucg_rate > 0.0 and not disable_dropout:
        # TODO(synk): the bernoulli draw stays in plain JAX so the jax.random stream is
        # reproducible; exact reproduction of torch's RNG stream is inherently impossible.
        drop = jax.random.bernoulli(rng, p=ucg_rate, shape=(B,))
        # mask * c + (1 - mask) * (n_classes - 1), exact on integer class ids.
        idx = jnp.where(drop, jnp.int32(n_classes - 1), c)
    else:
        idx = c

    # Clamp so an out-of-range / negative id cannot turn into a data-dependent OOB DMA.
    # (torch nn.Embedding raises on OOB ids; silent zeros would hide upstream bugs.)
    idx = jnp.clip(idx, 0, N - 1).astype(jnp.int32)

    # Present table/output 3-D so every block is (1, 1, E): last two block dims equal the
    # full array dims (layout-legal for any N, B) and stores are lane-dense full vregs.
    table3 = lax.reshape(embedding_table, (N, 1, E))
    itemsize = jnp.dtype(embedding_table.dtype).itemsize

    grid_spec = pltpu.PrefetchScalarGridSpec(
        num_scalar_prefetch=1,                       # idx -> SMEM, fed to index_maps
        grid=(B,),
        in_specs=[
            # Row gather: block index along the class axis comes straight from the ids.
            pl.BlockSpec((1, 1, E), lambda i, ids: (ids[i], 0, 0)),
        ],
        out_specs=pl.BlockSpec((1, 1, E), lambda i, ids: (i, 0, 0)),
    )

    out = pl.pallas_call(
        _row_gather_kernel,
        out_shape=jax.ShapeDtypeStruct((B, 1, E), embedding_table.dtype),
        grid_spec=grid_spec,
        compiler_params=pltpu.CompilerParams(
            dimension_semantics=("parallel",),       # independent rows; shards on v7x megacore
        ),
        cost_estimate=pl.CostEstimate(
            flops=0,
            transcendentals=0,
            bytes_accessed=2 * B * E * itemsize + 4 * B,  # row reads + row writes + ids
        ),
    )(idx, table3)

    return out  # (B, 1, E) — matches torch nn.Embedding(batch[key][:, None])


if __name__ == "__main__":
    B = 8

    key0 = jax.random.PRNGKey(0)
    k_emb, k_cls, k_drop = jax.random.split(key0, 3)

    # nn.Embedding(n_classes, embed_dim) default init ~ N(0, 1)
    embedding_table = jax.random.normal(k_emb, (N_CLASSES, EMBED_DIM), dtype=jnp.float32)
    class_ids = jax.random.randint(k_cls, (B,), 0, N_CLASSES, dtype=jnp.int32)
    batch = {"class": class_ids}

    out = class_embedder_forward(batch, embedding_table, rng=k_drop)
    out = jax.block_until_ready(out)

    # Pure-JAX reference (same bernoulli draw -> same mask/ids)
    drop = jax.random.bernoulli(k_drop, p=UCG_RATE, shape=(B,))
    ref_idx = jnp.where(drop, jnp.int32(N_CLASSES - 1), class_ids)
    ref = embedding_table[ref_idx][:, None, :]

    assert out.shape == (B, 1, EMBED_DIM), out.shape
    assert out.dtype == jnp.float32
    assert jnp.allclose(out, ref), "mismatch vs pure-JAX reference"

    # Also exercise the disable_dropout path (no UCG replacement).
    out_nd = class_embedder_forward(batch, embedding_table, rng=k_drop,
                                    disable_dropout=True)
    out_nd = jax.block_until_ready(out_nd)
    assert jnp.allclose(out_nd, embedding_table[class_ids][:, None, :])

    print("KERNEL_OK")
</pallas_src>

<mosaic_0001>
module attributes {stable_mosaic.version = 11 : i64} {
  func.func @_row_gather_kernel(%arg0: i32, %arg1: memref<8xi32, #tpu.memory_space<smem>>, %arg2: memref<1x1x128xf32, #tpu.memory_space<vmem>>, %arg3: memref<1x1x128xf32, #tpu.memory_space<vmem>>) attributes {dimension_semantics = [#tpu.dimension_semantics<parallel>], iteration_bounds = array<i64: 8>, scalar_prefetch = 1 : i64, scratch_operands = 0 : i64, tpu.core_type = #tpu.core_type<tc>, window_params = [{transform_indices = @transform_0, window_bounds = array<i64: 1, 1, 128>}, {transform_indices = @transform_1, window_bounds = array<i64: 1, 1, 128>}]} {
    %c0 = arith.constant 0 : index
    %c0_0 = arith.constant 0 : index
    %c0_1 = arith.constant 0 : index
    %0 = vector.load %arg2[%c0, %c0_0, %c0_1] : memref<1x1x128xf32, #tpu.memory_space<vmem>>, vector<1x1x128xf32>
    %c0_2 = arith.constant 0 : index
    %c0_3 = arith.constant 0 : index
    %c0_4 = arith.constant 0 : index
    %1 = vector.load %arg3[%c0_2, %c0_3, %c0_4] : memref<1x1x128xf32, #tpu.memory_space<vmem>>, vector<1x1x128xf32>
    tpu.vector_store %arg3[%c0_2, %c0_3, %c0_4], %0 {strides = array<i32>} : memref<1x1x128xf32, #tpu.memory_space<vmem>>, vector<1x1x128xf32>,
    return
  }
  func.func @transform_0(%arg0: i32, %arg1: memref<8xi32, #tpu.memory_space<smem>>) -> (i32, i32, i32) {
    %0 = arith.index_cast %arg0 : i32 to index
    %1 = memref.load %arg1[%0] : memref<8xi32, #tpu.memory_space<smem>>
    %c0_i32 = arith.constant 0 : i32
    %c0_i32_0 = arith.constant 0 : i32
    %c0_i32_1 = arith.constant 0 : i32
    return %1, %c0_i32, %c0_i32_0 : i32, i32, i32
  }
  func.func @transform_1(%arg0: i32, %arg1: memref<8xi32, #tpu.memory_space<smem>>) -> (i32, i32, i32) {
    %c0_i32 = arith.constant 0 : i32
    %c0_i32_0 = arith.constant 0 : i32
    %c0_i32_1 = arith.constant 0 : i32
    return %arg0, %c0_i32, %c0_i32_0 : i32, i32, i32
  }
}

</mosaic_0001>

<llo_original>
// kernel: tpu_custom_call.1
$region0: #{tpu_custom_call.1}
  #allocation0 [shape = 'u32[]', space=smem, size = 0x4, offset = 0x4, fixed_abs, tag = 'smem constant byte address 0x4 - core index']
  #allocation1 [shape = 'u32[144,128]{1,0:T(1,128)}', space=vmem, size = 0x12000, scoped, tag = 'internal scratch']
  #allocation2 [shape = 's32[1]{0}', space=sflag, size = 0x4, scoped, tag = 'scoped memory for tpu_custom_call.1']
  #allocation3 [shape = 'u8[512]{0}', space=smem, size = 0x200, scoped, tag = 'prefetched SMEM operand 0']
  %s0 = inlined_call_operand.hbm [shape: s32[8], index: 0, kind: input, shape index: {}]
  %s1 = inlined_call_operand.hbm [shape: f32[16,1,128], index: 1, kind: input, shape index: {}]
  %s2 = inlined_call_operand.hbm [shape: f32[8,1,128], index: 2, kind: output, shape index: {}]
  %s3 = sld [smem:[#allocation0]]
  $region41: #{tpu_custom_call.1} parent=0
    _
  %s5 = ssub.s32 1, %s3
  %s6 = scalar_select 0, %s5, %s3
  %8 = dma.hbm_to_smem %s0, 16, [#allocation3], [#allocation2]
  %9 = dma.done [#allocation2], 16
  %10 = sfence
  $region1: #{tpu_custom_call.1} parent=0
    #allocation4 [shape = 'u8[1024]{0}', space=vmem, size = 0x400, scoped, tag = 'input window, operand 1']
    #allocation5 [shape = 's32[2]{0}', space=sflag, size = 0x8, scoped, tag = 'scoped memory for tpu_custom_call.1']
    #allocation6 [shape = 's32[2]{0}', space=sflag, size = 0x8, scoped, tag = 'scoped memory for tpu_custom_call.1']
    #allocation7 [shape = 'u8[1024]{0}', space=vmem, size = 0x400, scoped, tag = 'output window, operand 0']
    %11 = vsyncpa [#allocation5], 0
    %s12 = scalar_lea.sflag [#allocation5], 1
    %13 = vsyncpa %s12, 0
    %14 = vsyncpa [#allocation6], 0
    %s15 = scalar_lea.sflag [#allocation6], 1
    %16 = vsyncpa %s15, 0
    loop: start=0, step=1, limit=10
    $region2: #{tpu_custom_call.1} parent=1 // loop_pre_header
      _
    $region3: #{tpu_custom_call.1} parent=1 // loop_header
      %s18 = sphi 0, %s22
      %p19 = scmp.ge.s32.totalorder %s18, 10
      %s30 = sphi 0, %s32
      %s33 = sphi 0, %s30
      %s34 = sphi 0, %s33
      %s50 = sphi 0, %s34
      %s56 = sphi 0, %s58
      %s59 = sphi 0, %s56
      %s60 = sphi 0, %s59
      %s76 = sphi 0, %s60
    $region4: #{tpu_custom_call.1} parent=1 // loop_header_branch
      %21 = sbr.rel (%p19) target = $region8
    $region5: #{tpu_custom_call.1} parent=1 // loop_body
      %s23 = ssub.s32 %s18, 1
      %s24 = ssub.s32 %s18, 2
      %s25 = sadd.s32 %s18, 1
      %s26 = sld [smem:[#allocation3 + %s18]]
      %s27 = sld [smem:[#allocation3 + %s25]]
      %s28 = ssub.s32 %s26, %s27
      %p29 = scmp.eq.s32.totalorder %s28, 0
      %s31 = sadd.s32 %s30, 1
      %s32 = scalar_select %p29, %s30, %s31
      %p35 = pneg %p29
      %p36 = scmp.eq.s32.totalorder %s18, 7
      %p37 = por %p35, %p36
      %p38 = scmp.ne.s32.totalorder %s30, %s33
      %p39 = scmp.eq.s32.totalorder %s18, 0
      %p40 = por %p38, %p39
      %p41 = scmp.ne.s32.totalorder %s30, %s33
      %p42 = scmp.eq.s32.totalorder %s23, 7
      %p43 = por %p41, %p42
      %p44 = scmp.ne.s32.totalorder %s33, %s34
      %p45 = scmp.eq.s32.totalorder %s23, 0
      %p46 = por %p44, %p45
      %p47 = scmp.ne.s32.totalorder %s33, %s34
      %p48 = scmp.eq.s32.totalorder %s24, 7
      %p49 = por %p47, %p48
      %p51 = scmp.ne.s32.totalorder %s34, %s50
      %p52 = scmp.eq.s32.totalorder %s24, 0
      %p53 = por %p51, %p52
      %s54 = ssub.s32 %s18, %s25
      %p55 = scmp.eq.s32.totalorder %s54, 0
      %s57 = sadd.s32 %s56, 1
      %s58 = scalar_select %p55, %s56, %s57
      %p61 = pneg %p55
      %p62 = scmp.eq.s32.totalorder %s18, 7
      %p63 = por %p61, %p62
      %p64 = scmp.ne.s32.totalorder %s56, %s59
      %p65 = scmp.eq.s32.totalorder %s18, 0
      %p66 = por %p64, %p65
      %p67 = scmp.ne.s32.totalorder %s56, %s59
      %p68 = scmp.eq.s32.totalorder %s23, 7
      %p69 = por %p67, %p68
      %p70 = scmp.ne.s32.totalorder %s59, %s60
      %p71 = scmp.eq.s32.totalorder %s23, 0
      %p72 = por %p70, %p71
      %p73 = scmp.ne.s32.totalorder %s59, %s60
      %p74 = scmp.eq.s32.totalorder %s24, 7
      %p75 = por %p73, %p74
      %p77 = scmp.ne.s32.totalorder %s60, %s76
      %p78 = scmp.eq.s32.totalorder %s24, 0
      %p79 = por %p77, %p78
      %p80 = scmp.le.s32.totalorder 1, %s18
      %p81 = scmp.lt.s32.totalorder %s18, 9
      %p82 = pnand %p80, %p81
      %p83 = pneg %p82
      // Predicated region
      $region9: #{tpu_custom_call.1} parent=5 // pred_check
        _
      $region10: #{tpu_custom_call.1} parent=5 // pred_check_branch
        %85 = sbr.rel (%p82) target = $region12
      $region11: #{tpu_custom_call.1} parent=5 // pred_region
        %s86 = ssub.s32 %s18, 1
      $region12: #{tpu_custom_call.1} parent=5 // pred_fallthru
        _
      %p87 = scmp.lt.s32.totalorder %s18, 8
      // Predicated region
      $region13: #{tpu_custom_call.1} parent=5 // pred_check
        %p88 = pneg %p87
      $region14: #{tpu_custom_call.1} parent=5 // pred_check_branch
        %90 = sbr.rel (%p88) target = $region16
      $region15: #{tpu_custom_call.1} parent=5 // pred_region
        // Predicated region
        $region17: #{tpu_custom_call.1} parent=15 // pred_check
          %p91 = pneg %p40
        $region18: #{tpu_custom_call.1} parent=15 // pred_check_branch
          %93 = sbr.rel (%p91) target = $region20
        $region19: #{tpu_custom_call.1} parent=15 // pred_region
          %s94 = sand.u32 %s30, 1
          %s95 = scalar_lea.sflag [#allocation5], %s94
          %s96 = sand.u32 %s30, 1
          %s97 = scalar_lea.vmem [#allocation4], %s96
          %s98 = sld [smem:[#allocation3 + %s18]]
          %s100 = ssub.s32 16, 16
          %101 = vsyncadd %s95, %s100
          %s102 = smul.addr %s98, 16
          %s103 = scalar_lea.hbm %s1, %s102
          %s105 = sshll.u32 %s97, 4
          %s106 = int_to_ptr.vmem [resolvable:$true] %s105
          %108 = dma.hbm_to_vmem [thread:$0]  %s103, 16, %s106, %s95
        $region20: #{tpu_custom_call.1} parent=15 // pred_fallthru
          _
      $region16: #{tpu_custom_call.1} parent=5 // pred_fallthru
        _
      %p109 = scmp.le.s32.totalorder 1, %s18
      %p110 = scmp.lt.s32.totalorder %s18, 9
      %p111 = pnand %p109, %p110
      %p112 = pneg %p111
      // Predicated region
      $region21: #{tpu_custom_call.1} parent=5 // pred_check
        _
      $region22: #{tpu_custom_call.1} parent=5 // pred_check_branch
        %114 = sbr.rel (%p111) target = $region24
      $region23: #{tpu_custom_call.1} parent=5 // pred_region
        %s115 = ssub.s32 %s18, 1
        %s116 = sand.u32 %s33, 1
        %s117 = scalar_lea.sflag [#allocation5], %s116
        %s118 = sand.u32 %s33, 1
        %s119 = scalar_lea.vmem [#allocation4], %s118
        // Predicated region
        $region25: #{tpu_custom_call.1} parent=23 // pred_check
          %p120 = pneg %p46
        $region26: #{tpu_custom_call.1} parent=23 // pred_check_branch
          %122 = sbr.rel (%p120) target = $region28
        $region27: #{tpu_custom_call.1} parent=23 // pred_region
          %123 = dma.done %s117, 16
        $region28: #{tpu_custom_call.1} parent=23 // pred_fallthru
          _
        %s124 = sand.u32 %s33, 1
        %s125 = scalar_lea.sflag [#allocation5], %s124
        %s126 = sand.u32 %s33, 1
        %s127 = scalar_lea.vmem [#allocation4], %s126
        %p128 = pneg %p46
        %p129 = pneg %p43
        %p130 = pneg %p72
        %p131 = pneg %p69
        %s132 = sand.u32 %s59, 1
        %s133 = scalar_lea.sflag [#allocation6], %s132
        %s134 = sand.u32 %s59, 1
        %s135 = scalar_lea.vmem [#allocation7], %s134
        %s136 = sld [smem:[#allocation3 + %s23]]
        %v137 = vld [vmem:[%s119] sm:$0x1]
        %138 = vst [vmem:[%s135] sm:$0x1] %v137
        %s139 = sand.u32 %s59, 1
        %s140 = scalar_lea.sflag [#allocation6], %s139
        %s141 = sand.u32 %s59, 1
        %s142 = scalar_lea.vmem [#allocation7], %s141
        // Predicated region
        $region29: #{tpu_custom_call.1} parent=23 // pred_check
          %p143 = pneg %p69
        $region30: #{tpu_custom_call.1} parent=23 // pred_check_branch
          %145 = sbr.rel (%p143) target = $region32
        $region31: #{tpu_custom_call.1} parent=23 // pred_region
          %s147 = ssub.s32 16, 16
          %148 = vsyncadd %s140, %s147
          %s149 = smul.addr %s23, 16
          %s150 = scalar_lea.hbm %s2, %s149
          %s152 = sshll.u32 %s142, 4
          %s153 = int_to_ptr.vmem [resolvable:$true] %s152
          %155 = dma.vmem_to_hbm [thread:$0]  %s153, 16, %s150, %s140
        $region32: #{tpu_custom_call.1} parent=23 // pred_fallthru
          _
      $region24: #{tpu_custom_call.1} parent=5 // pred_fallthru
        _
      %p156 = scmp.le.s32.totalorder 2, %s18
      // Predicated region
      $region33: #{tpu_custom_call.1} parent=5 // pred_check
        %p157 = pneg %p156
      $region34: #{tpu_custom_call.1} parent=5 // pred_check_branch
        %159 = sbr.rel (%p157) target = $region36
      $region35: #{tpu_custom_call.1} parent=5 // pred_region
        %s160 = ssub.s32 %s18, 2
        // Predicated region
        $region37: #{tpu_custom_call.1} parent=35 // pred_check
          %p161 = pneg %p75
        $region38: #{tpu_custom_call.1} parent=35 // pred_check_branch
          %163 = sbr.rel (%p161) target = $region40
        $region39: #{tpu_custom_call.1} parent=35 // pred_region
          %s164 = sand.u32 %s60, 1
          %s165 = scalar_lea.sflag [#allocation6], %s164
          %s166 = sand.u32 %s60, 1
          %s167 = scalar_lea.vmem [#allocation7], %s166
          %168 = dma.done %s165, 16
        $region40: #{tpu_custom_call.1} parent=35 // pred_fallthru
          _
      $region36: #{tpu_custom_call.1} parent=5 // pred_fallthru
        _
    $region6: #{tpu_custom_call.1} parent=1 // loop_footer
      %s22 = sadd.s32 1, %s18
    $region7: #{tpu_custom_call.1} parent=1 // loop_footer_branch
      %17 = sbr.rel target = $region3
    $region8: #{tpu_custom_call.1} parent=1 // loop_exit
      _
    %169 = vsyncpa [#allocation5], 1
    %s170 = scalar_lea.sflag [#allocation5], 1
    %171 = vsyncpa %s170, 1
    %172 = vsyncpa [#allocation6], 1
    %s173 = scalar_lea.sflag [#allocation6], 1
    %174 = vsyncpa %s173, 1

</llo_original>
